<compile_context>
chip_gen: v5e
topology: v5e:2x2
jax: 0.10.0
libtpu: 0.0.40
codegen_flags: <defaults>
</compile_context>

<pallas_src>
import jax
import jax.numpy as jnp
from jax.experimental import pallas as pl
from jax.experimental.pallas import tpu as pltpu


_SLAB_ROWS = 104   # 8 (W1) + 8 (b1 pad) + 24 (W2) + 8 (b2 pad) + 48 (W3) + 8 (b3 pad)
_SLAB_COLS = 128
_OUT_COLS = 96     # row-major NCHW flatten of (1, 24, 4)
_TB_CAP = 4096     # rows per batch tile (f32 out double-buffer ~3 MB at the cap)


def _round_up(x, m):
    return (x + m - 1) // m * m


# ----------------------------------------------------------------------------
# One-time folding of Linear / ConvTranspose2d weights into one param slab
# ----------------------------------------------------------------------------
def _pack_params(params):
    w_lin, b_lin = params["w_lin"], params["b_lin"]          # (24, 8), (24,)
    w_c1, b_c1 = params["w_c1"], params["b_c1"]              # (4, 2, 2, 2), (2,)
    w_c2, b_c2 = params["w_c2"], params["b_c2"]              # (2, 1, 2, 2), (1,)

    # Layer 1: Linear.  h1[b, c*6+p]
    W1 = w_lin.T.astype(jnp.float32)                         # (8, 24)
    b1 = b_lin.astype(jnp.float32)                           # (24,)

    # Layer 2: ConvT(4->2, k=2, s=2) on (4, 6, 1) input, folded to dense.
    # rows:  f1 = cin*6 + p
    # cols:  f2 = co*24 + (2p+kh)*2 + kw   (NCHW flatten of the (2, 12, 2) output)
    eye6 = jnp.eye(6, dtype=jnp.float32)
    W2 = jnp.einsum("pq,cokl->cpoqkl", eye6, w_c1.astype(jnp.float32)).reshape(24, 48)
    b2 = jnp.repeat(b_c1.astype(jnp.float32), 24)            # (48,)  b_c1[co] per block

    # Layer 3: ConvT(2->1, k=2, s=2) on (2, 12, 2) input, folded to dense.
    # rows:  f2 = ci*24 + i*2 + j
    # cols:  f_out = (2i+kh)*4 + (2j+kw)   (row-major flatten of (24, 4))
    eye12 = jnp.eye(12, dtype=jnp.float32)
    eye2 = jnp.eye(2, dtype=jnp.float32)
    W3 = jnp.einsum("ab,de,ckl->cadbkel",
                    eye12, eye2, w_c2[:, 0].astype(jnp.float32)).reshape(48, 96)
    b3 = jnp.broadcast_to(b_c2.astype(jnp.float32), (96,))   # (96,)

    slab = jnp.zeros((_SLAB_ROWS, _SLAB_COLS), jnp.float32)
    slab = slab.at[0:8, 0:24].set(W1)
    slab = slab.at[8, 0:24].set(b1)
    slab = slab.at[16:40, 0:48].set(W2)
    slab = slab.at[40, 0:48].set(b2)
    slab = slab.at[48:96, 0:96].set(W3)
    slab = slab.at[96, 0:96].set(b3)
    return slab


# ----------------------------------------------------------------------------
# Fused Pallas kernel: all three layers, activations VMEM-resident
# ----------------------------------------------------------------------------
def _fused_decoder_kernel(x_ref, p_ref, o_ref):
    x = x_ref[...]                                     # (TB, 8)

    # --- Layer 1: Linear(8->24) + ReLU (MXU; the MXU slot is otherwise idle).
    w1 = p_ref[0:8, 0:24]                              # (8, 24)
    b1 = p_ref[8:9, 0:24]                              # (1, 24)
    h1 = jnp.maximum(
        jnp.dot(x, w1, preferred_element_type=jnp.float32) + b1, 0.0)   # (TB, 24)

    # --- Layer 2: conv1 folded to block-diagonal (24, 48) matmul + ReLU (MXU).
    w2 = p_ref[16:40, 0:48]                            # (24, 48)
    b2 = p_ref[40:41, 0:48]                            # (1, 48)
    h2 = jnp.maximum(
        jnp.dot(h1, w2, preferred_element_type=jnp.float32) + b2, 0.0)  # (TB, 48)

    # --- Layer 3: conv2 folded to block-diagonal (48, 96) matmul (MXU).
    w3 = p_ref[48:96, 0:_OUT_COLS]                     # (48, 96)
    b3 = p_ref[96:97, 0:_OUT_COLS]                     # (1, 96)
    o_ref[...] = (jnp.dot(h2, w3, preferred_element_type=jnp.float32)
                  + b3).astype(o_ref.dtype)            # (TB, 96)


# ----------------------------------------------------------------------------
# ConvDecoder forward (slab is the pre-packed parameter tile)
# ----------------------------------------------------------------------------
def conv_decoder_forward(X, slab):
    B = X.shape[0]
    # Pad the batch only to the sublane granularity (8), never to the tile.
    B_pad = _round_up(max(B, 8), 8)
    x_p = X.astype(jnp.float32)
    if B_pad != B:
        x_p = jnp.pad(x_p, ((0, B_pad - B), (0, 0)))

    # Batch tile: multiple of 8, big enough to amortize per-step overhead,
    # >= 2 grid steps when possible (v7x megacore), capped at _TB_CAP rows.
    if B_pad <= 8:
        TB = B_pad
    else:
        TB = min(_TB_CAP, _round_up((B_pad + 1) // 2, 8))
    num_tiles = pl.cdiv(B_pad, TB)      # ragged last tile: Pallas masks OOB rows

    out = pl.pallas_call(
        _fused_decoder_kernel,
        out_shape=jax.ShapeDtypeStruct((B_pad, _OUT_COLS), jnp.float32),
        grid=(num_tiles,),
        in_specs=[
            pl.BlockSpec((TB, 8), lambda i: (i, 0)),                     # activations
            pl.BlockSpec((_SLAB_ROWS, _SLAB_COLS), lambda i: (0, 0)),    # resident params
        ],
        out_specs=pl.BlockSpec((TB, _OUT_COLS), lambda i: (i, 0)),
        compiler_params=pltpu.CompilerParams(
            dimension_semantics=("parallel",),          # shard batch across TCs (v7x)
            vmem_limit_bytes=16 * 1024 * 1024,          # safe on v5e/v6e/v7x
        ),
    )(x_p, slab)

    # Columns are already the row-major NCHW flatten of (1, 24, 4); the row
    # slice is a no-op whenever B is a multiple of 8.
    return out[:B].reshape(B, 1, 24, 4)


# ----------------------------------------------------------------------------
# Pure-JAX reference (direct transposed-conv scatter) for a sanity check
# ----------------------------------------------------------------------------
def _conv_t_ref(x, w, b, stride=2):
    B, Cin, H, W = x.shape
    _, Cout, KH, KW = w.shape
    out = jnp.zeros((B, Cout, (H - 1) * stride + KH, (W - 1) * stride + KW),
                    jnp.float32)
    for kh in range(KH):
        for kw in range(KW):
            contrib = jnp.einsum("bchw,cd->bdhw", x, w[:, :, kh, kw])
            out = out.at[:, :, kh::stride, kw::stride].add(contrib)
    return out + b[None, :, None, None]


def _reference_forward(X, params):
    B = X.shape[0]
    h = jnp.maximum(X @ params["w_lin"].T + params["b_lin"], 0.0)
    h = h.reshape(B, 4, 6, 1)
    h = jnp.maximum(_conv_t_ref(h, params["w_c1"], params["b_c1"]), 0.0)
    return _conv_t_ref(h, params["w_c2"], params["b_c2"])


# ----------------------------------------------------------------------------
# Deterministic parameter init (shapes from the module's __init__)
# ----------------------------------------------------------------------------
def init_params(key):
    ks = jax.random.split(key, 6)
    return {
        "w_lin": jax.random.normal(ks[0], (24, 8), jnp.float32) * 0.3,
        "b_lin": jax.random.normal(ks[1], (24,), jnp.float32) * 0.1,
        "w_c1":  jax.random.normal(ks[2], (4, 2, 2, 2), jnp.float32) * 0.3,
        "b_c1":  jax.random.normal(ks[3], (2,), jnp.float32) * 0.1,
        "w_c2":  jax.random.normal(ks[4], (2, 1, 2, 2), jnp.float32) * 0.3,
        "b_c2":  jax.random.normal(ks[5], (1,), jnp.float32) * 0.1,
    }


if __name__ == "__main__":
    key = jax.random.PRNGKey(0)
    k_param, k_x = jax.random.split(key)
    params = init_params(k_param)

    # Build the packed parameter slab ONCE (outside the jitted forward).
    slab = jax.block_until_ready(_pack_params(params))

    fwd = jax.jit(conv_decoder_forward)

    # Small check (B=2: exercises the 8-row sublane padding + single-tile grid).
    B = 2
    X = jax.random.normal(k_x, (B, 8), jnp.float32)
    out = jax.block_until_ready(fwd(X, slab))
    assert out.shape == (B, 1, 24, 4), out.shape
    ref = _reference_forward(X, params)
    assert jnp.allclose(out, ref, atol=2e-4, rtol=2e-4), (
        float(jnp.max(jnp.abs(out - ref))))

    # Even two-tile grid (B=1040 -> TB=520, 2 parallel steps, no dead rows).
    B2 = 1040
    X2 = jax.random.normal(jax.random.fold_in(k_x, 1), (B2, 8), jnp.float32)
    out2 = jax.block_until_ready(fwd(X2, slab))
    ref2 = _reference_forward(X2, params)
    assert out2.shape == (B2, 1, 24, 4), out2.shape
    assert jnp.allclose(out2, ref2, atol=2e-4, rtol=2e-4), (
        float(jnp.max(jnp.abs(out2 - ref2))))

    # Ragged last tile + non-multiple-of-8 batch (B=1234 -> B_pad=1240, TB=624).
    B3 = 1234
    X3 = jax.random.normal(jax.random.fold_in(k_x, 2), (B3, 8), jnp.float32)
    out3 = jax.block_until_ready(fwd(X3, slab))
    ref3 = _reference_forward(X3, params)
    assert out3.shape == (B3, 1, 24, 4), out3.shape
    assert jnp.allclose(out3, ref3, atol=2e-4, rtol=2e-4), (
        float(jnp.max(jnp.abs(out3 - ref3))))

    print("KERNEL_OK")
</pallas_src>

<mosaic_0001>
module attributes {stable_mosaic.version = 11 : i64} {
  func.func @_fused_decoder_kernel(%arg0: i32, %arg1: memref<8x8xf32, #tpu.memory_space<vmem>>, %arg2: memref<104x128xf32, #tpu.memory_space<vmem>>, %arg3: memref<8x96xf32, #tpu.memory_space<vmem>>) attributes {dimension_semantics = [#tpu.dimension_semantics<parallel>], iteration_bounds = array<i64: 1>, scalar_prefetch = 0 : i64, scratch_operands = 0 : i64, tpu.core_type = #tpu.core_type<tc>, window_params = [{transform_indices = @transform_0, window_bounds = array<i64: 8, 8>}, {pipeline_mode = #tpu.pipeline_mode<synchronous>, transform_indices = @transform_1, window_bounds = array<i64: 104, 128>}, {transform_indices = @transform_2, window_bounds = array<i64: 8, 96>}]} {
    %c0 = arith.constant 0 : index
    %c0_0 = arith.constant 0 : index
    %0 = vector.load %arg1[%c0, %c0_0] : memref<8x8xf32, #tpu.memory_space<vmem>>, vector<8x8xf32>
    %c0_1 = arith.constant 0 : index
    %c0_2 = arith.constant 0 : index
    %1 = vector.load %arg2[%c0_1, %c0_2] : memref<104x128xf32, #tpu.memory_space<vmem>>, vector<8x24xf32>
    %c8 = arith.constant 8 : index
    %c0_3 = arith.constant 0 : index
    %2 = vector.load %arg2[%c8, %c0_3] : memref<104x128xf32, #tpu.memory_space<vmem>>, vector<1x24xf32>
    %cst = arith.constant dense<0.000000e+00> : vector<8x24xf32>
    %3 = tpu.matmul %0, %1, %cst {dimension_numbers = #tpu.dot_dimension_numbers<[1], [0], [0], [1], [0, 0, 1, 1], [], []>} : vector<8x8xf32>, vector<8x24xf32>, vector<8x24xf32> -> vector<8x24xf32>
    %4 = vector.broadcast %2 : vector<1x24xf32> to vector<8x24xf32>
    %5 = arith.addf %3, %4 : vector<8x24xf32>
    %cst_4 = arith.constant 0.000000e+00 : f32
    %6 = vector.broadcast %cst_4 : f32 to vector<8x24xf32>
    %7 = arith.maximumf %5, %6 : vector<8x24xf32>
    %c16 = arith.constant 16 : index
    %c0_5 = arith.constant 0 : index
    %8 = vector.load %arg2[%c16, %c0_5] : memref<104x128xf32, #tpu.memory_space<vmem>>, vector<24x48xf32>
    %c40 = arith.constant 40 : index
    %c0_6 = arith.constant 0 : index
    %9 = vector.load %arg2[%c40, %c0_6] : memref<104x128xf32, #tpu.memory_space<vmem>>, vector<1x48xf32>
    %cst_7 = arith.constant dense<0.000000e+00> : vector<8x48xf32>
    %10 = tpu.matmul %7, %8, %cst_7 {dimension_numbers = #tpu.dot_dimension_numbers<[1], [0], [0], [1], [0, 0, 1, 1], [], []>} : vector<8x24xf32>, vector<24x48xf32>, vector<8x48xf32> -> vector<8x48xf32>
    %11 = vector.broadcast %9 : vector<1x48xf32> to vector<8x48xf32>
    %12 = arith.addf %10, %11 : vector<8x48xf32>
    %cst_8 = arith.constant 0.000000e+00 : f32
    %13 = vector.broadcast %cst_8 : f32 to vector<8x48xf32>
    %14 = arith.maximumf %12, %13 : vector<8x48xf32>
    %c48 = arith.constant 48 : index
    %c0_9 = arith.constant 0 : index
    %15 = vector.load %arg2[%c48, %c0_9] : memref<104x128xf32, #tpu.memory_space<vmem>>, vector<48x96xf32>
    %c96 = arith.constant 96 : index
    %c0_10 = arith.constant 0 : index
    %16 = vector.load %arg2[%c96, %c0_10] : memref<104x128xf32, #tpu.memory_space<vmem>>, vector<1x96xf32>
    %cst_11 = arith.constant dense<0.000000e+00> : vector<8x96xf32>
    %17 = tpu.matmul %14, %15, %cst_11 {dimension_numbers = #tpu.dot_dimension_numbers<[1], [0], [0], [1], [0, 0, 1, 1], [], []>} : vector<8x48xf32>, vector<48x96xf32>, vector<8x96xf32> -> vector<8x96xf32>
    %18 = vector.broadcast %16 : vector<1x96xf32> to vector<8x96xf32>
    %19 = arith.addf %17, %18 : vector<8x96xf32>
    %c0_12 = arith.constant 0 : index
    %c0_13 = arith.constant 0 : index
    %20 = vector.load %arg3[%c0_12, %c0_13] : memref<8x96xf32, #tpu.memory_space<vmem>>, vector<8x96xf32>
    tpu.vector_store %arg3[%c0_12, %c0_13], %19 {strides = array<i32>} : memref<8x96xf32, #tpu.memory_space<vmem>>, vector<8x96xf32>,
    return
  }
  func.func @transform_0(%arg0: i32) -> (i32, i32) {
    %c0_i32 = arith.constant 0 : i32
    %c0_i32_0 = arith.constant 0 : i32
    return %arg0, %c0_i32 : i32, i32
  }
  func.func @transform_1(%arg0: i32) -> (i32, i32) {
    %c0_i32 = arith.constant 0 : i32
    %c0_i32_0 = arith.constant 0 : i32
    %c0_i32_1 = arith.constant 0 : i32
    return %c0_i32, %c0_i32_0 : i32, i32
  }
  func.func @transform_2(%arg0: i32) -> (i32, i32) {
    %c0_i32 = arith.constant 0 : i32
    %c0_i32_0 = arith.constant 0 : i32
    return %arg0, %c0_i32 : i32, i32
  }
}

</mosaic_0001>

<llo_original>
// kernel: conv_decoder_forward.1
$region0: #{conv_decoder_forward.1}
  #allocation0 [shape = 'u32[]', space=smem, size = 0x4, offset = 0x4, fixed_abs, tag = 'smem constant byte address 0x4 - core index']
  #allocation1 [shape = 'u32[72,128]{1,0:T(1,128)}', space=vmem, size = 0x9000, scoped, tag = 'internal scratch']
  %s0 = inlined_call_operand.vmem [shape: f32[8,8], index: 0, kind: input, shape index: {}]
  %s1 = inlined_call_operand.hbm [shape: f32[104,128], index: 1, kind: input, shape index: {}]
  %s2 = inlined_call_operand.vmem [shape: f32[8,96], index: 2, kind: output, shape index: {}]
  %s3 = sld [smem:[#allocation0]]
  $region22: #{conv_decoder_forward.1} parent=0
    _
  %s5 = ssub.s32 1, %s3
  %s6 = scalar_select 0, %s5, %s3
  $region1: #{conv_decoder_forward.1} parent=0
    #allocation2 [shape = 'u8[53248]{0}', space=vmem, size = 0xd000, scoped, tag = 'input window, operand 1, single buffered']
    #allocation3 [shape = 's32[1]{0}', space=sflag, size = 0x4, scoped, tag = 'scoped memory for conv_decoder_forward.1']
    %7 = vsyncpa [#allocation3], 0
    // Predicated region
    $region2: #{conv_decoder_forward.1} parent=1 // pred_check
      _
    $region3: #{conv_decoder_forward.1} parent=1 // pred_check_branch
      %9 = sbr.rel (0) target = $region5
    $region4: #{conv_decoder_forward.1} parent=1 // pred_region
      _
    $region5: #{conv_decoder_forward.1} parent=1 // pred_fallthru
      _
    // Predicated region
    $region6: #{conv_decoder_forward.1} parent=1 // pred_check
      _
    $region7: #{conv_decoder_forward.1} parent=1 // pred_check_branch
      %11 = sbr.rel (0) target = $region9
    $region8: #{conv_decoder_forward.1} parent=1 // pred_region
      %13 = vsyncadd [#allocation3], 0
      %s14 = sshll.u32 %s1, 4
      %s15 = int_to_ptr.hbm [resolvable:$true] %s14
      %s16 = sshll.u32 [#allocation2], 4
      %s17 = int_to_ptr.vmem [resolvable:$true] %s16
      %22 = dma.hbm_to_vmem [thread:$0]  %s15, 1664, %s17, [#allocation3], 128, 128, 8
    $region9: #{conv_decoder_forward.1} parent=1 // pred_fallthru
      _
    // Predicated region
    $region10: #{conv_decoder_forward.1} parent=1 // pred_check
      _
    $region11: #{conv_decoder_forward.1} parent=1 // pred_check_branch
      %24 = sbr.rel (0) target = $region13
    $region12: #{conv_decoder_forward.1} parent=1 // pred_region
      %26 = dma.done [#allocation3], 1664
    $region13: #{conv_decoder_forward.1} parent=1 // pred_fallthru
      _
    %v27 = vld [vmem:[%s0] sm:$0xff]
    %v28 = vld [vmem:[#allocation2] sm:$0xff]
    %v29 = vld [vmem:[#allocation2 + $0x8] sm:$0x1]
    %v30 = vperm.slane %v29, 0
    %vm31 = vcmask 64512
    %v33 = vsel %vm31, %v27, 0
    %35 = vmatpush.msra.mxu0 0.0
    %36 = vmatpush.msra.mxu0 0.0
    %37 = vmatpush.msra.mxu0 0.0
    %38 = vmatpush.msra.mxu0 0.0
    %39 = vmatpush.msra.mxu0 0.0
    %40 = vmatpush.msra.mxu0 0.0
    %41 = vmatpush.msra.mxu0 0.0
    %42 = vmatpush.msra.mxu0 0.0
    %43 = vmatpush.msra.mxu0 0.0
    %44 = vmatpush.msra.mxu0 0.0
    %45 = vmatpush.msra.mxu0 0.0
    %46 = vmatpush.msra.mxu0 0.0
    %47 = vmatpush.msra.mxu0 0.0
    %48 = vmatpush.msra.mxu0 0.0
    %49 = vmatpush.msra.mxu0 0.0
    %50 = vmatpush.msra.mxu0 %v28
    %51 = vmatmul.f32.gmra.mxu0 %v33
    %v52 = vpop.f32.mrf.mxu0
    %v53 = vadd.f32 %v30, %v52
    %54 = vdwg.mxu0
    %v55 = vmax.f32 %v53, 0.0
    %v56 = vld [vmem:[#allocation2 + $0x10] sm:$0xff]
    %v57 = vld [vmem:[#allocation2 + $0x18] sm:$0xff]
    %v58 = vld [vmem:[#allocation2 + $0x20] sm:$0xff]
    %v59 = vld [vmem:[#allocation2 + $0x28] sm:$0x1]
    %v60 = vperm.slane %v59, 0
    %vm61 = vcmask 195584
    %v63 = vsel %vm61, %v55, 0
    %65 = vmatpush.msra.mxu0 0.0
    %66 = vmatpush.msra.mxu0 0.0
    %67 = vmatpush.msra.mxu0 0.0
    %68 = vmatpush.msra.mxu0 0.0
    %69 = vmatpush.msra.mxu0 0.0
    %70 = vmatpush.msra.mxu0 0.0
    %71 = vmatpush.msra.mxu0 0.0
    %72 = vmatpush.msra.mxu0 0.0
    %73 = vmatpush.msra.mxu0 0.0
    %74 = vmatpush.msra.mxu0 0.0
    %75 = vmatpush.msra.mxu0 0.0
    %76 = vmatpush.msra.mxu0 0.0
    %77 = vmatpush.msra.mxu0 0.0
    %78 = vmatpush.msra.mxu0 %v58
    %79 = vmatpush.msra.mxu0 %v57
    %80 = vmatpush.msra.mxu0 %v56
    %81 = vmatmul.f32.gmra.mxu0 %v63
    %v82 = vpop.f32.mrf.mxu0
    %v83 = vadd.f32 %v60, %v82
    %84 = vdwg.mxu0
    %v85 = vmax.f32 %v83, 0.0
    %v86 = vld [vmem:[#allocation2 + $0x30] sm:$0xff]
    %v87 = vld [vmem:[#allocation2 + $0x38] sm:$0xff]
    %v88 = vld [vmem:[#allocation2 + $0x40] sm:$0xff]
    %v89 = vld [vmem:[#allocation2 + $0x48] sm:$0xff]
    %v90 = vld [vmem:[#allocation2 + $0x50] sm:$0xff]
    %v91 = vld [vmem:[#allocation2 + $0x58] sm:$0xff]
    %v92 = vld [vmem:[#allocation2 + $0x60] sm:$0x1]
    %v93 = vperm.slane %v92, 0
    %vm94 = vcmask 392192
    %v96 = vsel %vm94, %v85, 0
    %98 = vmatpush.msra.mxu0 0.0
    %99 = vmatpush.msra.mxu0 0.0
    %100 = vmatpush.msra.mxu0 0.0
    %101 = vmatpush.msra.mxu0 0.0
    %102 = vmatpush.msra.mxu0 0.0
    %103 = vmatpush.msra.mxu0 0.0
    %104 = vmatpush.msra.mxu0 0.0
    %105 = vmatpush.msra.mxu0 0.0
    %106 = vmatpush.msra.mxu0 0.0
    %107 = vmatpush.msra.mxu0 0.0
    %108 = vmatpush.msra.mxu0 %v91
    %109 = vmatpush.msra.mxu0 %v90
    %110 = vmatpush.msra.mxu0 %v89
    %111 = vmatpush.msra.mxu0 %v88
    %112 = vmatpush.msra.mxu0 %v87
    %113 = vmatpush.msra.mxu0 %v86
    %114 = vmatmul.f32.gmra.mxu0 %v96
    %v115 = vpop.f32.mrf.mxu0
    %v116 = vadd.f32 %v93, %v115
    %117 = vdwg.mxu0
    %vm118 = vcmask 785408
    %119 = vst.msk [vmem:[%s2] sm:$0xff] %vm118, %v116
    // Predicated region
    $region14: #{conv_decoder_forward.1} parent=1 // pred_check
      _
    $region15: #{conv_decoder_forward.1} parent=1 // pred_check_branch
      %121 = sbr.rel (0) target = $region17
    $region16: #{conv_decoder_forward.1} parent=1 // pred_region
      _
    $region17: #{conv_decoder_forward.1} parent=1 // pred_fallthru
      _
    // Predicated region
    $region18: #{conv_decoder_forward.1} parent=1 // pred_check
      _
    $region19: #{conv_decoder_forward.1} parent=1 // pred_check_branch
      %123 = sbr.rel (0) target = $region21
    $region20: #{conv_decoder_forward.1} parent=1 // pred_region
      _
    $region21: #{conv_decoder_forward.1} parent=1 // pred_fallthru
      _
    %124 = vsyncpa [#allocation3], 1

</llo_original>
